<compile_context>
chip_gen: v7x
topology: tpu7x:2x2x1
jax: 0.10.0
libtpu: 0.0.40
codegen_flags: <defaults>
</compile_context>

<pallas_src>
import jax
import jax.numpy as jnp
from jax.experimental import pallas as pl
from jax.experimental.pallas import tpu as pltpu

_LANE = 128


def _round_up(a, b):
    return (a + b - 1) // b * b


def _vmem_budget_bytes():
    """Per-generation VMEM budget: 85% of physical, capped at 100 MiB.
    v7x (64 MiB physical) -> ~54 MiB; v5e/v6e (128 MiB) -> 100 MiB."""
    cap = 64 * 1024 * 1024
    try:
        info = pltpu.get_tpu_info()
        cap = int(getattr(info, "vmem_capacity_bytes", cap)) or cap
    except Exception:
        pass
    return min(int(cap * 0.85), 100 * 1024 * 1024)


def _choose_tiles(M, d_model, d_ff, x_item, w_item, out_item, need_acc, budget):
    """Pick (tm, tk, resident) from an explicit VMEM budget.

    Streamed per-step residency (pipelined operands double-buffered):
      x tile 2*tm*d_model*x_item, out tile 2*tm*d_model*out_item,
      acc tm*d_model*4 (only for non-f32 outputs), h temp tm*tk*4,
      W1/W2 tiles 4*d_model*tk*w_item, biases 8*(tk + d_model).
    Resident path: same but tk == d_ff and no acc scratch.
    """
    M8 = _round_up(max(M, 1), 8)
    rowf = d_model * (2 * x_item + 2 * out_item + (4 if need_acc else 0))

    def stream_bytes(tm, tk):
        return (tm * rowf + tm * tk * 4 + 4 * d_model * tk * w_item
                + 8 * tk + 8 * d_model)

    def resident_bytes(tm):
        return (2 * tm * d_model * (x_item + out_item) + tm * d_ff * 4
                + 4 * d_model * d_ff * w_item + 8 * d_ff + 8 * d_model)

    # --- row tile: largest 8-aligned candidate that can host at least one 128-wide
    #     d_ff chunk (or the fully-resident weights, whichever is smaller).
    cands = {c for c in (1024, 768, 512, 384, 256, 192, 128, 96, 64, 48, 32, 16, 8)
             if c <= M8}
    if M8 <= 1024:
        cands.add(M8)
    tm = 8  # TODO(synk): add an N (d_model) tile for extremely wide models (d_model>=8192).
    for c in sorted(cands, reverse=True):
        if min(stream_bytes(c, _LANE), resident_bytes(c)) <= budget:
            tm = c
            break

    # --- megacore: if a single tile would cover all rows but there is enough work,
    #     split into two row tiles so the "parallel" axis can use both v7x cores.
    if tm >= M8 and M8 >= 512:
        tm = _round_up(max(M8 // 2, 8), 8)

    # --- d_ff handling: weights fully resident when they fit; otherwise largest
    #     256- (else 128-) aligned chunk that fits, preferring divisors of the
    #     128-padded d_ff, falling back to padding d_ff up to a multiple of tk.
    if resident_bytes(tm) <= budget:
        return tm, d_ff, True

    d_ff128 = _round_up(d_ff, _LANE)
    tk_max = (budget - tm * rowf - 8 * d_model) // (4 * tm + 4 * d_model * w_item + 8)
    tk_max = max(min(tk_max, d_ff128), _LANE)
    tk = None
    for align in (256, _LANE):
        c = (tk_max // align) * align
        while c >= align:
            if d_ff128 % c == 0:
                tk = c
                break
            c -= align
        if tk is not None:
            break
    if tk is None:
        tk = max((tk_max // _LANE) * _LANE, _LANE)
    return tm, tk, False


def ffn_resident_kernel(x_ref, w1_ref, b1_ref, w2_ref, b2_ref, o_ref):
    # Whole FFN for one row tile; W1/W2 stay resident in VMEM across the whole grid
    # (constant index_map -> DMA'd once, not once per row tile).
    h = jnp.dot(x_ref[...], w1_ref[...], preferred_element_type=jnp.float32)
    h = jnp.maximum(h + b1_ref[...], 0.0)
    y = jnp.dot(h.astype(w2_ref.dtype), w2_ref[...],
                preferred_element_type=jnp.float32)
    o_ref[...] = (y + b2_ref[...]).astype(o_ref.dtype)


def ffn_streamed_kernel(x_ref, w1_ref, b1_ref, w2_ref, b2_ref, o_ref, *acc):
    # d_ff streamed in chunks (reduction = grid axis 1).  f32 outputs accumulate
    # directly into o_ref; narrower outputs accumulate into the f32 scratch.
    acc_ref = acc[0] if acc else o_ref
    k = pl.program_id(1)

    # Bias + ReLU per chunk: live intermediate is only (tm, tk), never (tm, d_ff).
    h = jnp.dot(x_ref[...], w1_ref[...], preferred_element_type=jnp.float32)
    h = jnp.maximum(h + b1_ref[...], 0.0)
    part = jnp.dot(h.astype(w2_ref.dtype), w2_ref[...],
                   preferred_element_type=jnp.float32)

    @pl.when(k == 0)
    def _():
        acc_ref[...] = part            # first chunk: plain store, no zero-init pass

    @pl.when(k > 0)
    def _():
        acc_ref[...] += part

    @pl.when(k == pl.num_programs(1) - 1)
    def _():
        o_ref[...] = (acc_ref[...] + b2_ref[...]).astype(o_ref.dtype)


def feed_forward_network(x, w1, b1, w2, b2, *, compute_dtype=None, vmem_budget=None):
    """relu(x @ w1 + b1) @ w2 + b2   (PyTorch FeedForwardNetwork.forward).

    x : (batch, seq, d_model)
    w1: (d_model, d_ff)   b1: (d_ff,)     [already transposed vs. nn.Linear.weight]
    w2: (d_ff, d_model)   b2: (d_model,)

    compute_dtype: MXU input dtype (e.g. jnp.bfloat16).  For best perf store the
      weights in bf16 at model init; the casts below only run when dtypes differ.
    vmem_budget:   optional override of the tile-sizing VMEM budget (testing).
    """
    batch, seq, d_model = x.shape
    d_ff = w1.shape[1]
    out_dtype = x.dtype

    if compute_dtype is not None:
        if x.dtype != compute_dtype:
            x = x.astype(compute_dtype)
        if w1.dtype != compute_dtype:
            w1 = w1.astype(compute_dtype)
        if w2.dtype != compute_dtype:
            w2 = w2.astype(compute_dtype)
    # Biases stay f32: they are added to f32 accumulations inside the kernel.
    b1 = b1.astype(jnp.float32)
    b2 = b2.astype(jnp.float32)

    M = batch * seq
    x_item = x.dtype.itemsize
    w_item = w1.dtype.itemsize
    out_item = jnp.dtype(out_dtype).itemsize
    need_acc = jnp.dtype(out_dtype) != jnp.dtype(jnp.float32)

    hw_budget = _vmem_budget_bytes()
    size_budget = int(vmem_budget) if vmem_budget is not None else hw_budget
    tm, tk, resident = _choose_tiles(M, d_model, d_ff, x_item, w_item, out_item,
                                     need_acc, size_budget)

    M_pad = _round_up(M, tm)
    x2d = x.reshape(M, d_model)
    if M_pad != M:
        x2d = jnp.pad(x2d, ((0, M_pad - M), (0, 0)))

    if resident:
        d_ff_pad = d_ff
    else:
        d_ff_pad = _round_up(d_ff, tk)
        if d_ff_pad != d_ff:
            # Zero-padded W1 cols / W2 rows / b1 contribute exactly 0 after ReLU.
            # TODO(synk): pre-pad the weights once at model init instead of per call.
            w1 = jnp.pad(w1, ((0, 0), (0, d_ff_pad - d_ff)))
            w2 = jnp.pad(w2, ((0, d_ff_pad - d_ff), (0, 0)))
            b1 = jnp.pad(b1, ((0, d_ff_pad - d_ff),))

    b1_2d = b1.reshape(1, d_ff_pad)
    b2_2d = b2.reshape(1, d_model)

    n_m = M_pad // tm
    n_k = 1 if resident else d_ff_pad // tk

    weight_passes = 1 if resident else n_m          # streamed weights re-read per row tile
    bytes_accessed = (x2d.size * x_item
                      + weight_passes * (w1.size + w2.size) * w_item
                      + weight_passes * (b1_2d.size + b2_2d.size) * 4
                      + M_pad * d_model * out_item)
    cost = pl.CostEstimate(flops=4 * M_pad * d_model * d_ff_pad,
                           transcendentals=0,
                           bytes_accessed=int(bytes_accessed))

    if resident:
        kernel = ffn_resident_kernel
        grid = (n_m,)
        in_specs = [
            pl.BlockSpec((tm, d_model), lambda i: (i, 0)),          # x rows
            pl.BlockSpec((d_model, d_ff_pad), lambda i: (0, 0)),    # W1 (resident)
            pl.BlockSpec((1, d_ff_pad), lambda i: (0, 0)),          # b1
            pl.BlockSpec((d_ff_pad, d_model), lambda i: (0, 0)),    # W2 (resident)
            pl.BlockSpec((1, d_model), lambda i: (0, 0)),           # b2
        ]
        out_specs = pl.BlockSpec((tm, d_model), lambda i: (i, 0))
        scratch = []
        semantics = ("parallel",)
    else:
        kernel = ffn_streamed_kernel
        grid = (n_m, n_k)                                           # reduction last
        in_specs = [
            pl.BlockSpec((tm, d_model), lambda i, k: (i, 0)),       # x rows
            pl.BlockSpec((d_model, tk), lambda i, k: (0, k)),       # W1 columns
            pl.BlockSpec((1, tk), lambda i, k: (0, k)),             # b1 chunk
            pl.BlockSpec((tk, d_model), lambda i, k: (k, 0)),       # W2 rows
            pl.BlockSpec((1, d_model), lambda i, k: (0, 0)),        # b2
        ]
        out_specs = pl.BlockSpec((tm, d_model), lambda i, k: (i, 0))
        scratch = [pltpu.VMEM((tm, d_model), jnp.float32)] if need_acc else []
        semantics = ("parallel", "arbitrary")

    out2d = pl.pallas_call(
        kernel,
        out_shape=jax.ShapeDtypeStruct((M_pad, d_model), out_dtype),
        grid_spec=pltpu.PrefetchScalarGridSpec(
            num_scalar_prefetch=0,
            grid=grid,
            in_specs=in_specs,
            out_specs=out_specs,
            scratch_shapes=scratch,
        ),
        compiler_params=pltpu.CompilerParams(
            dimension_semantics=semantics,
            vmem_limit_bytes=hw_budget,          # 85% of physical, <=100 MiB
        ),
        cost_estimate=cost,
    )(x2d, w1, b1_2d, w2, b2_2d)

    if M_pad != M:
        out2d = out2d[:M]
    return out2d.reshape(batch, seq, d_model)


if __name__ == "__main__":
    # Small shapes consistent with the module: (batch, seq, d_model), d_ff.
    batch, seq, d_model, d_ff = 2, 8, 32, 64

    key = jax.random.PRNGKey(0)
    kx, kw1, kb1, kw2, kb2, kw3, kb3, kw4, kb4 = jax.random.split(key, 9)

    # PyTorch nn.Linear init: U(-1/sqrt(fan_in), 1/sqrt(fan_in)); weights stored
    # already transposed relative to PyTorch so the kernel computes x @ W.
    bound1 = 1.0 / (d_model ** 0.5)
    bound2 = 1.0 / (d_ff ** 0.5)
    w1 = jax.random.uniform(kw1, (d_model, d_ff), jnp.float32, -bound1, bound1)
    b1 = jax.random.uniform(kb1, (d_ff,), jnp.float32, -bound1, bound1)
    w2 = jax.random.uniform(kw2, (d_ff, d_model), jnp.float32, -bound2, bound2)
    b2 = jax.random.uniform(kb2, (d_model,), jnp.float32, -bound2, bound2)

    x = jax.random.normal(kx, (batch, seq, d_model), jnp.float32)
    ref = jnp.maximum(x @ w1 + b1, 0.0) @ w2 + b2

    # Tolerances: 1e-2 for f32 paths (covers MXU default-precision differences
    # between the in-kernel dot and the XLA reference), 1.5e-1 for bf16 inputs.

    # 1) f32, resident-weights path (weights fit VMEM -> single grid axis).
    out_f32 = jax.block_until_ready(feed_forward_network(x, w1, b1, w2, b2))
    assert out_f32.shape == (batch, seq, d_model)
    assert jnp.allclose(out_f32, ref, atol=1e-2, rtol=1e-2)

    # 2) bf16 MXU inputs, f32 accumulation, output keeps x.dtype (f32).
    out_bf16 = jax.block_until_ready(
        feed_forward_network(x, w1, b1, w2, b2, compute_dtype=jnp.bfloat16))
    assert out_bf16.dtype == x.dtype
    assert jnp.allclose(out_bf16, ref, atol=1.5e-1, rtol=1.5e-1)

    # 3) Ragged batch*seq exercises the row-padding path (M=15 -> padded to 16).
    x_r = jax.random.normal(kx, (3, 5, d_model), jnp.float32)
    ref_r = jnp.maximum(x_r @ w1 + b1, 0.0) @ w2 + b2
    out_r = jax.block_until_ready(feed_forward_network(x_r, w1, b1, w2, b2))
    assert out_r.shape == (3, 5, d_model)
    assert jnp.allclose(out_r, ref_r, atol=1e-2, rtol=1e-2)

    # 4) Forced-streamed path (tiny VMEM budget, d_ff=320 -> pad to 384, tk=128,
    #    3 accumulation steps, f32 output accumulates directly into o_ref).
    d_ff_s = 320
    bound1s = 1.0 / (d_model ** 0.5)
    bound2s = 1.0 / (d_ff_s ** 0.5)
    w1s = jax.random.uniform(kw3, (d_model, d_ff_s), jnp.float32, -bound1s, bound1s)
    b1s = jax.random.uniform(kb3, (d_ff_s,), jnp.float32, -bound1s, bound1s)
    w2s = jax.random.uniform(kw4, (d_ff_s, d_model), jnp.float32, -bound2s, bound2s)
    b2s = jax.random.uniform(kb4, (d_model,), jnp.float32, -bound2s, bound2s)
    ref_s = jnp.maximum(x @ w1s + b1s, 0.0) @ w2s + b2s
    out_s = jax.block_until_ready(
        feed_forward_network(x, w1s, b1s, w2s, b2s, vmem_budget=100_000))
    assert jnp.allclose(out_s, ref_s, atol=1e-2, rtol=1e-2)

    # 5) Forced-streamed path with bf16 input/output -> exercises the f32 scratch.
    x_bf = x.astype(jnp.bfloat16)
    ref_b = jnp.maximum(x_bf.astype(jnp.float32) @ w1s + b1s, 0.0) @ w2s + b2s
    out_b = jax.block_until_ready(
        feed_forward_network(x_bf, w1s, b1s, w2s, b2s,
                             compute_dtype=jnp.bfloat16, vmem_budget=100_000))
    assert out_b.dtype == jnp.bfloat16
    assert jnp.allclose(out_b.astype(jnp.float32), ref_b, atol=1.5e-1, rtol=1.5e-1)

    print("KERNEL_OK")
</pallas_src>

<mosaic_0001>
module attributes {stable_mosaic.version = 11 : i64} {
  func.func @ffn_resident_kernel(%arg0: i32, %arg1: memref<16x32xf32, #tpu.memory_space<vmem>>, %arg2: memref<32x64xf32, #tpu.memory_space<vmem>>, %arg3: memref<1x64xf32, #tpu.memory_space<vmem>>, %arg4: memref<64x32xf32, #tpu.memory_space<vmem>>, %arg5: memref<1x32xf32, #tpu.memory_space<vmem>>, %arg6: memref<16x32xf32, #tpu.memory_space<vmem>>) attributes {dimension_semantics = [#tpu.dimension_semantics<parallel>], iteration_bounds = array<i64: 1>, scalar_prefetch = 0 : i64, scratch_operands = 0 : i64, tpu.core_type = #tpu.core_type<tc>, window_params = [{transform_indices = @transform_0, window_bounds = array<i64: 16, 32>}, {pipeline_mode = #tpu.pipeline_mode<synchronous>, transform_indices = @transform_1, window_bounds = array<i64: 32, 64>}, {pipeline_mode = #tpu.pipeline_mode<synchronous>, transform_indices = @transform_2, window_bounds = array<i64: 1, 64>}, {pipeline_mode = #tpu.pipeline_mode<synchronous>, transform_indices = @transform_3, window_bounds = array<i64: 64, 32>}, {pipeline_mode = #tpu.pipeline_mode<synchronous>, transform_indices = @transform_4, window_bounds = array<i64: 1, 32>}, {transform_indices = @transform_5, window_bounds = array<i64: 16, 32>}]} {
    %c0 = arith.constant 0 : index
    %c0_0 = arith.constant 0 : index
    %0 = vector.load %arg1[%c0, %c0_0] : memref<16x32xf32, #tpu.memory_space<vmem>>, vector<16x32xf32>
    %c0_1 = arith.constant 0 : index
    %c0_2 = arith.constant 0 : index
    %1 = vector.load %arg2[%c0_1, %c0_2] : memref<32x64xf32, #tpu.memory_space<vmem>>, vector<32x64xf32>
    %cst = arith.constant dense<0.000000e+00> : vector<16x64xf32>
    %2 = tpu.matmul %0, %1, %cst {dimension_numbers = #tpu.dot_dimension_numbers<[1], [0], [0], [1], [0, 0, 1, 1], [], []>} : vector<16x32xf32>, vector<32x64xf32>, vector<16x64xf32> -> vector<16x64xf32>
    %c0_3 = arith.constant 0 : index
    %c0_4 = arith.constant 0 : index
    %3 = vector.load %arg3[%c0_3, %c0_4] : memref<1x64xf32, #tpu.memory_space<vmem>>, vector<1x64xf32>
    %4 = vector.broadcast %3 : vector<1x64xf32> to vector<16x64xf32>
    %5 = arith.addf %2, %4 : vector<16x64xf32>
    %cst_5 = arith.constant 0.000000e+00 : f32
    %6 = vector.broadcast %cst_5 : f32 to vector<16x64xf32>
    %7 = arith.maximumf %5, %6 : vector<16x64xf32>
    %c0_6 = arith.constant 0 : index
    %c0_7 = arith.constant 0 : index
    %8 = vector.load %arg4[%c0_6, %c0_7] : memref<64x32xf32, #tpu.memory_space<vmem>>, vector<64x32xf32>
    %cst_8 = arith.constant dense<0.000000e+00> : vector<16x32xf32>
    %9 = tpu.matmul %7, %8, %cst_8 {dimension_numbers = #tpu.dot_dimension_numbers<[1], [0], [0], [1], [0, 0, 1, 1], [], []>} : vector<16x64xf32>, vector<64x32xf32>, vector<16x32xf32> -> vector<16x32xf32>
    %c0_9 = arith.constant 0 : index
    %c0_10 = arith.constant 0 : index
    %10 = vector.load %arg5[%c0_9, %c0_10] : memref<1x32xf32, #tpu.memory_space<vmem>>, vector<1x32xf32>
    %11 = vector.broadcast %10 : vector<1x32xf32> to vector<16x32xf32>
    %12 = arith.addf %9, %11 : vector<16x32xf32>
    %c0_11 = arith.constant 0 : index
    %c0_12 = arith.constant 0 : index
    %13 = vector.load %arg6[%c0_11, %c0_12] : memref<16x32xf32, #tpu.memory_space<vmem>>, vector<16x32xf32>
    tpu.vector_store %arg6[%c0_11, %c0_12], %12 {strides = array<i32>} : memref<16x32xf32, #tpu.memory_space<vmem>>, vector<16x32xf32>,
    return
  }
  func.func @transform_0(%arg0: i32) -> (i32, i32) {
    %c0_i32 = arith.constant 0 : i32
    %c0_i32_0 = arith.constant 0 : i32
    return %arg0, %c0_i32 : i32, i32
  }
  func.func @transform_1(%arg0: i32) -> (i32, i32) {
    %c0_i32 = arith.constant 0 : i32
    %c0_i32_0 = arith.constant 0 : i32
    %c0_i32_1 = arith.constant 0 : i32
    return %c0_i32, %c0_i32_0 : i32, i32
  }
  func.func @transform_2(%arg0: i32) -> (i32, i32) {
    %c0_i32 = arith.constant 0 : i32
    %c0_i32_0 = arith.constant 0 : i32
    %c0_i32_1 = arith.constant 0 : i32
    return %c0_i32, %c0_i32_0 : i32, i32
  }
  func.func @transform_3(%arg0: i32) -> (i32, i32) {
    %c0_i32 = arith.constant 0 : i32
    %c0_i32_0 = arith.constant 0 : i32
    %c0_i32_1 = arith.constant 0 : i32
    return %c0_i32, %c0_i32_0 : i32, i32
  }
  func.func @transform_4(%arg0: i32) -> (i32, i32) {
    %c0_i32 = arith.constant 0 : i32
    %c0_i32_0 = arith.constant 0 : i32
    %c0_i32_1 = arith.constant 0 : i32
    return %c0_i32, %c0_i32_0 : i32, i32
  }
  func.func @transform_5(%arg0: i32) -> (i32, i32) {
    %c0_i32 = arith.constant 0 : i32
    %c0_i32_0 = arith.constant 0 : i32
    return %arg0, %c0_i32 : i32, i32
  }
}

</mosaic_0001>

<llo_original>
// kernel: tpu_custom_call.1
$region0: #{tpu_custom_call.1}
  #allocation0 [shape = 'u32[]', space=smem, size = 0x4, offset = 0x4, fixed_abs, tag = 'smem constant byte address 0x4 - core index']
  #allocation1 [shape = 'u32[144,128]{1,0:T(1,128)}', space=vmem, size = 0x12000, scoped, tag = 'internal scratch']
  %s0 = inlined_call_operand.vmem [shape: f32[16,32], index: 0, kind: input, shape index: {}]
  %s1 = inlined_call_operand.vmem [shape: f32[32,64], index: 1, kind: input, shape index: {}]
  %s2 = inlined_call_operand.vmem [shape: f32[1,64], index: 2, kind: input, shape index: {}]
  %s3 = inlined_call_operand.vmem [shape: f32[64,32], index: 3, kind: input, shape index: {}]
  %s4 = inlined_call_operand.vmem [shape: f32[1,32], index: 4, kind: input, shape index: {}]
  %s5 = inlined_call_operand.hbm [shape: f32[16,32], index: 5, kind: output, shape index: {}]
  %s6 = sld [smem:[#allocation0]]
  $region30: #{tpu_custom_call.1} parent=0
    _
  %s8 = ssub.s32 1, %s6
  %s9 = scalar_select 0, %s8, %s6
  $region1: #{tpu_custom_call.1} parent=0
    #allocation2 [shape = 'u8[8192]{0}', space=vmem, size = 0x2000, scoped, tag = 'output window, operand 0, single buffered']
    #allocation3 [shape = 's32[1]{0}', space=sflag, size = 0x4, scoped, tag = 'scoped memory for tpu_custom_call.1']
    %10 = vsyncpa [#allocation3], 0
    // Predicated region
    $region2: #{tpu_custom_call.1} parent=1 // pred_check
      _
    $region3: #{tpu_custom_call.1} parent=1 // pred_check_branch
      %12 = sbr.rel (0) target = $region5
    $region4: #{tpu_custom_call.1} parent=1 // pred_region
      _
    $region5: #{tpu_custom_call.1} parent=1 // pred_fallthru
      _
    // Predicated region
    $region6: #{tpu_custom_call.1} parent=1 // pred_check
      _
    $region7: #{tpu_custom_call.1} parent=1 // pred_check_branch
      %14 = sbr.rel (0) target = $region9
    $region8: #{tpu_custom_call.1} parent=1 // pred_region
      _
    $region9: #{tpu_custom_call.1} parent=1 // pred_fallthru
      _
    // Predicated region
    $region10: #{tpu_custom_call.1} parent=1 // pred_check
      _
    $region11: #{tpu_custom_call.1} parent=1 // pred_check_branch
      %16 = sbr.rel (0) target = $region13
    $region12: #{tpu_custom_call.1} parent=1 // pred_region
      _
    $region13: #{tpu_custom_call.1} parent=1 // pred_fallthru
      _
    // Predicated region
    $region14: #{tpu_custom_call.1} parent=1 // pred_check
      _
    $region15: #{tpu_custom_call.1} parent=1 // pred_check_branch
      %18 = sbr.rel (0) target = $region17
    $region16: #{tpu_custom_call.1} parent=1 // pred_region
      _
    $region17: #{tpu_custom_call.1} parent=1 // pred_fallthru
      _
    // Predicated region
    $region18: #{tpu_custom_call.1} parent=1 // pred_check
      _
    $region19: #{tpu_custom_call.1} parent=1 // pred_check_branch
      %20 = sbr.rel (0) target = $region21
    $region20: #{tpu_custom_call.1} parent=1 // pred_region
      _
    $region21: #{tpu_custom_call.1} parent=1 // pred_fallthru
      _
    %v21 = vld [vmem:[%s0] sm:$0xff]
    %v22 = vld [vmem:[%s0 + $0x8] sm:$0xff]
    %v23 = vld [vmem:[%s1] sm:$0xff]
    %v24 = vld [vmem:[%s1 + $0x8] sm:$0xff]
    %v25 = vld [vmem:[%s1 + $0x10] sm:$0xff]
    %v26 = vld [vmem:[%s1 + $0x18] sm:$0xff]
    %v27 = vld [vmem:[%s2] sm:$0x1]
    %v29 = vlaneseq
    %v30 = vshrl.u32 %v29, 7
    %v31 = vsub.s32 0, %v30
    %v32 = vrot.slane %v27, %v31
    %vm34 = vcmask 261120
    %v36 = vsel %vm34, %v21, 0
    %v39 = vsel %vm34, %v22, 0
    %41 = vmatprep.subr.mxu0 0.0
    %42 = vmatpush1.msra.mxu0 %v23
    %43 = vmatprep.subr.mxu0 0.0
    %44 = vmatpush1.msra.mxu0 %v24
    %45 = vmatprep.subr.mxu0 0.0
    %46 = vmatpush1.msra.mxu0 %v25
    %47 = vmatprep.subr.mxu0 0.0
    %48 = vmatpush1.msra.mxu0 %v26
    %49 = vmatprep.subr.mxu0 0.0
    %50 = vmatpush1.msra.mxu0 0.0
    %51 = vmatprep.subr.mxu0 0.0
    %52 = vmatpush1.msra.mxu0 0.0
    %53 = vmatprep.subr.mxu0 0.0
    %54 = vmatpush1.msra.mxu0 0.0
    %55 = vmatprep.subr.mxu0 0.0
    %56 = vmatpush1.msra.mxu0 0.0
    %57 = vmatprep.subr.mxu0 0.0
    %58 = vmatpush1.msra.mxu0 0.0
    %59 = vmatprep.subr.mxu0 0.0
    %60 = vmatpush1.msra.mxu0 0.0
    %61 = vmatprep.subr.mxu0 0.0
    %62 = vmatpush1.msra.mxu0 0.0
    %63 = vmatprep.subr.mxu0 0.0
    %64 = vmatpush1.msra.mxu0 0.0
    %65 = vmatprep.subr.mxu0 0.0
    %66 = vmatpush1.msra.mxu0 0.0
    %67 = vmatprep.subr.mxu0 0.0
    %68 = vmatpush1.msra.mxu0 0.0
    %69 = vmatprep.subr.mxu0 0.0
    %70 = vmatpush1.msra.mxu0 0.0
    %71 = vmatprep.subr.mxu0 0.0
    %72 = vmatpush1.msra.mxu0 0.0
    %73 = vmatprep.subr.mxu0 0.0
    %74 = vmatpush1.msra.mxu0 0.0
    %75 = vmatprep.subr.mxu0 0.0
    %76 = vmatpush1.msra.mxu0 0.0
    %77 = vmatprep.subr.mxu0 0.0
    %78 = vmatpush1.msra.mxu0 0.0
    %79 = vmatprep.subr.mxu0 0.0
    %80 = vmatpush1.msra.mxu0 0.0
    %81 = vmatprep.subr.mxu0 0.0
    %82 = vmatpush1.msra.mxu0 0.0
    %83 = vmatprep.subr.mxu0 0.0
    %84 = vmatpush1.msra.mxu0 0.0
    %85 = vmatprep.subr.mxu0 0.0
    %86 = vmatpush1.msra.mxu0 0.0
    %87 = vmatprep.subr.mxu0 0.0
    %88 = vmatpush1.msra.mxu0 0.0
    %89 = vmatprep.subr.mxu0 0.0
    %90 = vmatpush1.msra.mxu0 0.0
    %91 = vmatprep.subr.mxu0 0.0
    %92 = vmatpush1.msra.mxu0 0.0
    %93 = vmatprep.subr.mxu0 0.0
    %94 = vmatpush1.msra.mxu0 0.0
    %95 = vmatprep.subr.mxu0 0.0
    %96 = vmatpush1.msra.mxu0 0.0
    %97 = vmatprep.subr.mxu0 0.0
    %98 = vmatpush1.msra.mxu0 0.0
    %99 = vmatprep.subr.mxu0 0.0
    %100 = vmatpush1.msra.mxu0 0.0
    %101 = vmatprep.subr.mxu0 0.0
    %102 = vmatpush1.msra.mxu0 0.0
    %103 = vmatprep.subr.mxu0 0.0
    %104 = vmatpush1.msra.mxu0 0.0
    %105 = vmatprep.mubr.f32.mxu0 0.0
    %106 = vmatmul.mubr.f32.gmra.mrb[0].mxu0 %v36
    %v107 = vpop.f32.mrb[0].mxu0
    %v108 = vadd.f32 %v32, %v107
    %v109 = vpop.f32.mrb[0].mxu0
    %110 = vmatprep.mubr.f32.mxu0 0.0
    %111 = vmatmul.mubr.f32.gmra.mrb[0].mxu0 %v39
    %v112 = vpop.f32.mrb[0].mxu0
    %v113 = vadd.f32 %v32, %v112
    %v114 = vpop.f32.mrb[0].mxu0
    %115 = vdwg.mxu0
    %v116 = vmax.f32 %v108, 0.0
    %v117 = vmax.f32 %v113, 0.0
    %v118 = vld [vmem:[%s3] sm:$0xff]
    %v119 = vld [vmem:[%s3 + $0x8] sm:$0xff]
    %v120 = vld [vmem:[%s3 + $0x10] sm:$0xff]
    %v121 = vld [vmem:[%s3 + $0x18] sm:$0xff]
    %v122 = vld [vmem:[%s3 + $0x20] sm:$0xff]
    %v123 = vld [vmem:[%s3 + $0x28] sm:$0xff]
    %v124 = vld [vmem:[%s3 + $0x30] sm:$0xff]
    %v125 = vld [vmem:[%s3 + $0x38] sm:$0xff]
    %v126 = vld [vmem:[%s4] sm:$0x1]
    %v128 = vlaneseq
    %v129 = vshrl.u32 %v128, 7
    %v130 = vsub.s32 0, %v129
    %v131 = vrot.slane %v126, %v130
    %vm133 = vcmask 523264
    %v135 = vsel %vm133, %v116, 0
    %v138 = vsel %vm133, %v117, 0
    %140 = vmatprep.subr.mxu0 0.0
    %141 = vmatpush1.msra.mxu0 %v118
    %142 = vmatprep.subr.mxu0 0.0
    %143 = vmatpush1.msra.mxu0 %v119
    %144 = vmatprep.subr.mxu0 0.0
    %145 = vmatpush1.msra.mxu0 %v120
    %146 = vmatprep.subr.mxu0 0.0
    %147 = vmatpush1.msra.mxu0 %v121
    %148 = vmatprep.subr.mxu0 0.0
    %149 = vmatpush1.msra.mxu0 %v122
    %150 = vmatprep.subr.mxu0 0.0
    %151 = vmatpush1.msra.mxu0 %v123
    %152 = vmatprep.subr.mxu0 0.0
    %153 = vmatpush1.msra.mxu0 %v124
    %154 = vmatprep.subr.mxu0 0.0
    %155 = vmatpush1.msra.mxu0 %v125
    %156 = vmatprep.subr.mxu0 0.0
    %157 = vmatpush1.msra.mxu0 0.0
    %158 = vmatprep.subr.mxu0 0.0
    %159 = vmatpush1.msra.mxu0 0.0
    %160 = vmatprep.subr.mxu0 0.0
    %161 = vmatpush1.msra.mxu0 0.0
    %162 = vmatprep.subr.mxu0 0.0
    %163 = vmatpush1.msra.mxu0 0.0
    %164 = vmatprep.subr.mxu0 0.0
    %165 = vmatpush1.msra.mxu0 0.0
    %166 = vmatprep.subr.mxu0 0.0
    %167 = vmatpush1.msra.mxu0 0.0
    %168 = vmatprep.subr.mxu0 0.0
    %169 = vmatpush1.msra.mxu0 0.0
    %170 = vmatprep.subr.mxu0 0.0
    %171 = vmatpush1.msra.mxu0 0.0
    %172 = vmatprep.subr.mxu0 0.0
    %173 = vmatpush1.msra.mxu0 0.0
    %174 = vmatprep.subr.mxu0 0.0
    %175 = vmatpush1.msra.mxu0 0.0
    %176 = vmatprep.subr.mxu0 0.0
    %177 = vmatpush1.msra.mxu0 0.0
    %178 = vmatprep.subr.mxu0 0.0
    %179 = vmatpush1.msra.mxu0 0.0
    %180 = vmatprep.subr.mxu0 0.0
    %181 = vmatpush1.msra.mxu0 0.0
    %182 = vmatprep.subr.mxu0 0.0
    %183 = vmatpush1.msra.mxu0 0.0
    %184 = vmatprep.subr.mxu0 0.0
    %185 = vmatpush1.msra.mxu0 0.0
    %186 = vmatprep.subr.mxu0 0.0
    %187 = vmatpush1.msra.mxu0 0.0
    %188 = vmatprep.subr.mxu0 0.0
    %189 = vmatpush1.msra.mxu0 0.0
    %190 = vmatprep.subr.mxu0 0.0
    %191 = vmatpush1.msra.mxu0 0.0
    %192 = vmatprep.subr.mxu0 0.0
    %193 = vmatpush1.msra.mxu0 0.0
    %194 = vmatprep.subr.mxu0 0.0
    %195 = vmatpush1.msra.mxu0 0.0
    %196 = vmatprep.subr.mxu0 0.0
    %197 = vmatpush1.msra.mxu0 0.0
    %198 = vmatprep.subr.mxu0 0.0
    %199 = vmatpush1.msra.mxu0 0.0
    %200 = vmatprep.subr.mxu0 0.0
    %201 = vmatpush1.msra.mxu0 0.0
    %202 = vmatprep.subr.mxu0 0.0
    %203 = vmatpush1.msra.mxu0 0.0
    %204 = vmatprep.mubr.f32.mxu0 0.0
    %205 = vmatmul.mubr.f32.gmra.mrb[0].mxu0 %v135
    %v206 = vpop.f32.mrb[0].mxu0
    %v207 = vadd.f32 %v131, %v206
    %v208 = vpop.f32.mrb[0].mxu0
    %209 = vmatprep.mubr.f32.mxu0 0.0
    %210 = vmatmul.mubr.f32.gmra.mrb[0].mxu0 %v138
    %v211 = vpop.f32.mrb[0].mxu0
    %v212 = vadd.f32 %v131, %v211
    %v213 = vpop.f32.mrb[0].mxu0
    %214 = vdwg.mxu0
    %215 = vst.msk [vmem:[#allocation2] sm:$0xff] %vm34, %v207
    %216 = vst.msk [vmem:[#allocation2 + $0x8] sm:$0xff] %vm34, %v212
    // Predicated region
    $region22: #{tpu_custom_call.1} parent=1 // pred_check
      _
    $region23: #{tpu_custom_call.1} parent=1 // pred_check_branch
      %218 = sbr.rel (0) target = $region25
    $region24: #{tpu_custom_call.1} parent=1 // pred_region
      %s220 = ssub.s32 256, 256
      %221 = vsyncadd [#allocation3], %s220
      %s222 = sshll.u32 [#allocation2], 4
      %s223 = int_to_ptr.vmem [resolvable:$true] %s222
      %228 = dma.vmem_to_hbm [thread:$0]  %s223, 256, %s5, [#allocation3], 128, 128, 8
    $region25: #{tpu_custom_call.1} parent=1 // pred_fallthru
      _
    // Predicated region
    $region26: #{tpu_custom_call.1} parent=1 // pred_check
      _
    $region27: #{tpu_custom_call.1} parent=1 // pred_check_branch
      %230 = sbr.rel (0) target = $region29
    $region28: #{tpu_custom_call.1} parent=1 // pred_region
      %231 = dma.done [#allocation3], 256
    $region29: #{tpu_custom_call.1} parent=1 // pred_fallthru
      _
    %232 = vsyncpa [#allocation3], 1

</llo_original>
